<compile_context>
chip_gen: v7x
topology: tpu7x:2x2x1
jax: 0.10.0
libtpu: 0.0.40
codegen_flags: <defaults>
</compile_context>

<pallas_src>
import functools

import jax
import jax.numpy as jnp
from jax import lax
from jax.experimental import pallas as pl
from jax.experimental.pallas import tpu as pltpu


def _silu(x):
    return x * jax.nn.sigmoid(x)


# ------------------------- fused Pallas kernel -------------------------

def _bottleneck_kernel(x_ref, w1_ref, w2_ref, s1_ref, b1_ref, s2_ref, b2_ref,
                       hpos_ref, wpos_ref, o_ref, *, H, W, add):
    """Fused cv1(1x1) -> cv2(3x3) -> (+x) for one image.

    x_ref : (C1, H*W)        activation, channels on sublanes, spatial on lanes
    w1_ref: (C_, C1)         1x1 conv weight
    w2_ref: (C2, 9*C_)       3x3 conv weight, K index = (dy*3+dx)*C_ + ci
    s*/b* : (C, 1)           folded BatchNorm scale / bias (f32)
    hpos/wpos: (1, H*W)      int32 row / col index of each flattened position
    o_ref : (C2, H*W)
    """
    HW = H * W
    x = x_ref[...]                       # (C1, HW), lane-dense
    cdt = x.dtype                        # matmul input dtype (f32 or bf16)

    # ---- cv1: 1x1 conv == matmul, f32 accumulate, fused BN + SiLU ----
    y1 = jnp.dot(w1_ref[...], x, preferred_element_type=jnp.float32)  # (C_, HW)
    y1 = y1 * s1_ref[...] + b1_ref[...]
    y1 = y1 * jax.nn.sigmoid(y1)         # SiLU (EUP)
    c_ = y1.shape[0]
    y1c = y1.astype(cdt)                 # back to matmul dtype (bf16-ready)

    # ---- cv2: 3x3 'same' conv via in-register im2col + single matmul ----
    h_pos = hpos_ref[...]                # (1, HW) int32
    w_pos = wpos_ref[...]                # (1, HW) int32
    zero = jnp.zeros((), cdt)
    taps = []
    for dy in range(3):
        for dx in range(3):
            s = (dy - 1) * W + (dx - 1)  # flat shift: tap[p] = y1[p + s]
            if s > 0:
                sh = jnp.concatenate(
                    [y1c[:, s:], jnp.zeros((c_, s), cdt)], axis=1)
            elif s < 0:
                sh = jnp.concatenate(
                    [jnp.zeros((c_, -s), cdt), y1c[:, :HW + s]], axis=1)
            else:
                sh = y1c
            hs = h_pos + (dy - 1)
            ws = w_pos + (dx - 1)
            valid = (hs >= 0) & (hs < H) & (ws >= 0) & (ws < W)
            taps.append(jnp.where(valid, sh, zero))
    patch = jnp.concatenate(taps, axis=0)                 # (9*C_, HW)

    y2 = jnp.dot(w2_ref[...], patch,
                 preferred_element_type=jnp.float32)      # (C2, HW)
    y2 = y2 * s2_ref[...] + b2_ref[...]
    y2 = y2 * jax.nn.sigmoid(y2)                          # SiLU
    if add:
        y2 = y2 + x.astype(jnp.float32)                   # residual, reuses x in VMEM
    o_ref[...] = y2.astype(o_ref.dtype)


# ------------------------- wrapper -------------------------

def bottleneck_pallas(x_nchw, params, shortcut=True):
    """Bottleneck forward. x_nchw: (N, C1, H, W)."""
    w1, w2 = params["w1"], params["w2"]          # (C_,C1,1,1), (C2,C_,3,3) OIHW
    s1, b1 = params["scale1"], params["bias1"]   # (C_,)
    s2, b2 = params["scale2"], params["bias2"]   # (C2,)

    N, C1, H, W = x_nchw.shape
    C_ = w1.shape[0]
    C2 = w2.shape[0]
    add = bool(shortcut) and (C1 == C2)
    HW = H * W
    dt = x_nchw.dtype

    # Free (contiguous) reshape: no transpose / pad passes through HBM.
    x_flat = x_nchw.reshape(N, C1, HW)

    w1_mat = w1[:, :, 0, 0].astype(dt)                               # (C_, C1)
    # (C2, C_, 3, 3) -> (C2, dy, dx, ci) -> (C2, 9*C_); K = (dy*3+dx)*C_ + ci
    w2_flat = jnp.transpose(w2, (0, 2, 3, 1)).reshape(C2, 9 * C_).astype(dt)

    s1c = s1.reshape(C_, 1).astype(jnp.float32)
    b1c = b1.reshape(C_, 1).astype(jnp.float32)
    s2c = s2.reshape(C2, 1).astype(jnp.float32)
    b2c = b2.reshape(C2, 1).astype(jnp.float32)

    pos = jnp.arange(HW, dtype=jnp.int32)
    h_pos = (pos // W).reshape(1, HW)
    w_pos = (pos % W).reshape(1, HW)

    kern = functools.partial(_bottleneck_kernel, H=H, W=W, add=add)

    out_flat = pl.pallas_call(
        kern,
        out_shape=jax.ShapeDtypeStruct((N, C2, HW), dt),
        grid=(N,),
        in_specs=[
            pl.BlockSpec((None, C1, HW), lambda b: (b, 0, 0)),   # x (per image)
            pl.BlockSpec((C_, C1), lambda b: (0, 0)),            # w1
            pl.BlockSpec((C2, 9 * C_), lambda b: (0, 0)),        # w2 (im2col K)
            pl.BlockSpec((C_, 1), lambda b: (0, 0)),             # scale1
            pl.BlockSpec((C_, 1), lambda b: (0, 0)),             # bias1
            pl.BlockSpec((C2, 1), lambda b: (0, 0)),             # scale2
            pl.BlockSpec((C2, 1), lambda b: (0, 0)),             # bias2
            pl.BlockSpec((1, HW), lambda b: (0, 0)),             # h index
            pl.BlockSpec((1, HW), lambda b: (0, 0)),             # w index
        ],
        out_specs=pl.BlockSpec((None, C2, HW), lambda b: (b, 0, 0)),
        compiler_params=pltpu.CompilerParams(
            dimension_semantics=("parallel",)),
    )(x_flat, w1_mat, w2_flat, s1c, b1c, s2c, b2c, h_pos, w_pos)

    return out_flat.reshape(N, C2, H, W)


# ------------------------- reference (pure JAX) -------------------------

def bottleneck_ref(x_nchw, params, shortcut=True):
    w1, w2 = params["w1"], params["w2"]
    s1, b1 = params["scale1"], params["bias1"]
    s2, b2 = params["scale2"], params["bias2"]
    c1, c2 = x_nchw.shape[1], w2.shape[0]
    add = bool(shortcut) and (c1 == c2)

    x = jnp.transpose(x_nchw, (0, 2, 3, 1))
    dn = ("NHWC", "HWIO", "NHWC")
    w1_hwio = jnp.transpose(w1, (2, 3, 1, 0))
    w2_hwio = jnp.transpose(w2, (2, 3, 1, 0))

    y = lax.conv_general_dilated(x, w1_hwio, (1, 1), "SAME",
                                 dimension_numbers=dn)
    y = _silu(y * s1 + b1)
    y = lax.conv_general_dilated(y, w2_hwio, (1, 1), "SAME",
                                 dimension_numbers=dn)
    y = _silu(y * s2 + b2)
    if add:
        y = y + x
    return jnp.transpose(y, (0, 3, 1, 2))


# ------------------------- main -------------------------

if __name__ == "__main__":
    key = jax.random.PRNGKey(0)

    # Bottleneck(c1=4, c2=4, shortcut=True, g=1, e=0.5)  => c_ = 2
    N, C1, H, W = 2, 4, 16, 16
    C2, e = 4, 0.5
    C_ = int(C2 * e)

    ks = jax.random.split(key, 9)
    x = jax.random.normal(ks[0], (N, C1, H, W), jnp.float32)

    w1 = 0.2 * jax.random.normal(ks[1], (C_, C1, 1, 1), jnp.float32)
    w2 = 0.2 * jax.random.normal(ks[2], (C2, C_, 3, 3), jnp.float32)

    # Synthetic eval-mode BatchNorm params folded to scale/bias.
    eps = 1e-5
    g1 = 1.0 + 0.1 * jax.random.normal(ks[3], (C_,), jnp.float32)
    be1 = 0.1 * jax.random.normal(ks[4], (C_,), jnp.float32)
    mu1 = 0.1 * jax.random.normal(ks[5], (C_,), jnp.float32)
    var1 = jnp.abs(1.0 + 0.1 * jax.random.normal(ks[6], (C_,), jnp.float32))
    g2 = 1.0 + 0.1 * jax.random.normal(ks[7], (C2,), jnp.float32)
    be2 = 0.1 * jax.random.normal(ks[8], (C2,), jnp.float32)
    mu2 = jnp.zeros((C2,), jnp.float32)
    var2 = jnp.ones((C2,), jnp.float32)

    scale1 = g1 / jnp.sqrt(var1 + eps)
    bias1 = be1 - mu1 * scale1
    scale2 = g2 / jnp.sqrt(var2 + eps)
    bias2 = be2 - mu2 * scale2

    params = dict(w1=w1, w2=w2, scale1=scale1, bias1=bias1,
                  scale2=scale2, bias2=bias2)

    out = bottleneck_pallas(x, params, shortcut=True)
    out = jax.block_until_ready(out)

    ref = bottleneck_ref(x, params, shortcut=True)
    assert out.shape == (N, C2, H, W)
    assert jnp.allclose(out, ref, atol=1e-4, rtol=1e-4)

    print("KERNEL_OK")
</pallas_src>

<mosaic_0001>
module attributes {stable_mosaic.version = 11 : i64} {
  func.func @_bottleneck_kernel(%arg0: i32, %arg1: memref<1x4x256xf32, #tpu.memory_space<vmem>>, %arg2: memref<2x4xf32, #tpu.memory_space<vmem>>, %arg3: memref<4x18xf32, #tpu.memory_space<vmem>>, %arg4: memref<2x1xf32, #tpu.memory_space<vmem>>, %arg5: memref<2x1xf32, #tpu.memory_space<vmem>>, %arg6: memref<4x1xf32, #tpu.memory_space<vmem>>, %arg7: memref<4x1xf32, #tpu.memory_space<vmem>>, %arg8: memref<1x256xi32, #tpu.memory_space<vmem>>, %arg9: memref<1x256xi32, #tpu.memory_space<vmem>>, %arg10: memref<1x4x256xf32, #tpu.memory_space<vmem>>) attributes {dimension_semantics = [#tpu.dimension_semantics<parallel>], iteration_bounds = array<i64: 2>, scalar_prefetch = 0 : i64, scratch_operands = 0 : i64, tpu.core_type = #tpu.core_type<tc>, window_params = [{transform_indices = @transform_0, window_bounds = array<i64: 1, 4, 256>}, {pipeline_mode = #tpu.pipeline_mode<synchronous>, transform_indices = @transform_1, window_bounds = array<i64: 2, 4>}, {pipeline_mode = #tpu.pipeline_mode<synchronous>, transform_indices = @transform_2, window_bounds = array<i64: 4, 18>}, {pipeline_mode = #tpu.pipeline_mode<synchronous>, transform_indices = @transform_3, window_bounds = array<i64: 2, 1>}, {pipeline_mode = #tpu.pipeline_mode<synchronous>, transform_indices = @transform_4, window_bounds = array<i64: 2, 1>}, {pipeline_mode = #tpu.pipeline_mode<synchronous>, transform_indices = @transform_5, window_bounds = array<i64: 4, 1>}, {pipeline_mode = #tpu.pipeline_mode<synchronous>, transform_indices = @transform_6, window_bounds = array<i64: 4, 1>}, {pipeline_mode = #tpu.pipeline_mode<synchronous>, transform_indices = @transform_7, window_bounds = array<i64: 1, 256>}, {pipeline_mode = #tpu.pipeline_mode<synchronous>, transform_indices = @transform_8, window_bounds = array<i64: 1, 256>}, {transform_indices = @transform_9, window_bounds = array<i64: 1, 4, 256>}]} {
    %c0 = arith.constant 0 : index
    %c0_0 = arith.constant 0 : index
    %c0_1 = arith.constant 0 : index
    %0 = vector.load %arg1[%c0, %c0_0, %c0_1] : memref<1x4x256xf32, #tpu.memory_space<vmem>>, vector<1x4x256xf32>
    %1 = vector.shape_cast %0 : vector<1x4x256xf32> to vector<4x256xf32>
    %c0_2 = arith.constant 0 : index
    %c0_3 = arith.constant 0 : index
    %2 = vector.load %arg2[%c0_2, %c0_3] : memref<2x4xf32, #tpu.memory_space<vmem>>, vector<2x4xf32>
    %cst = arith.constant dense<0.000000e+00> : vector<2x256xf32>
    %3 = tpu.matmul %2, %1, %cst {dimension_numbers = #tpu.dot_dimension_numbers<[1], [0], [0], [1], [0, 0, 1, 1], [], []>} : vector<2x4xf32>, vector<4x256xf32>, vector<2x256xf32> -> vector<2x256xf32>
    %c0_4 = arith.constant 0 : index
    %c0_5 = arith.constant 0 : index
    %4 = vector.load %arg4[%c0_4, %c0_5] : memref<2x1xf32, #tpu.memory_space<vmem>>, vector<2x1xf32>
    %5 = vector.broadcast %4 : vector<2x1xf32> to vector<2x256xf32>
    %6 = arith.mulf %3, %5 : vector<2x256xf32>
    %c0_6 = arith.constant 0 : index
    %c0_7 = arith.constant 0 : index
    %7 = vector.load %arg5[%c0_6, %c0_7] : memref<2x1xf32, #tpu.memory_space<vmem>>, vector<2x1xf32>
    %8 = vector.broadcast %7 : vector<2x1xf32> to vector<2x256xf32>
    %9 = arith.addf %6, %8 : vector<2x256xf32>
    %10 = arith.negf %9 : vector<2x256xf32>
    %11 = math.exp %10 : vector<2x256xf32>
    %cst_8 = arith.constant 1.000000e+00 : f32
    %12 = vector.broadcast %cst_8 : f32 to vector<2x256xf32>
    %13 = arith.addf %12, %11 : vector<2x256xf32>
    %14 = arith.divf %12, %13 : vector<2x256xf32>
    %15 = arith.mulf %9, %14 : vector<2x256xf32>
    %c0_9 = arith.constant 0 : index
    %c0_10 = arith.constant 0 : index
    %16 = vector.load %arg8[%c0_9, %c0_10] : memref<1x256xi32, #tpu.memory_space<vmem>>, vector<1x256xi32>
    %c0_11 = arith.constant 0 : index
    %c0_12 = arith.constant 0 : index
    %17 = vector.load %arg9[%c0_11, %c0_12] : memref<1x256xi32, #tpu.memory_space<vmem>>, vector<1x256xi32>
    %cst_13 = arith.constant 0.000000e+00 : f32
    %18 = vector.broadcast %cst_13 : f32 to vector<2x17xf32>
    %19 = vector.extract_strided_slice %15 {offsets = [0, 0], sizes = [2, 239], strides = [1, 1]} : vector<2x256xf32> to vector<2x239xf32>
    %20 = tpu.concatenate %18, %19 in 1 : vector<2x17xf32>, vector<2x239xf32> -> vector<2x256xf32>
    %c-1_i32 = arith.constant -1 : i32
    %21 = vector.broadcast %c-1_i32 : i32 to vector<1x256xi32>
    %22 = arith.addi %16, %21 : vector<1x256xi32>
    %c-1_i32_14 = arith.constant -1 : i32
    %23 = vector.broadcast %c-1_i32_14 : i32 to vector<1x256xi32>
    %24 = arith.addi %17, %23 : vector<1x256xi32>
    %c0_i32 = arith.constant 0 : i32
    %25 = vector.broadcast %c0_i32 : i32 to vector<1x256xi32>
    %26 = arith.cmpi sge, %22, %25 : vector<1x256xi32>
    %c16_i32 = arith.constant 16 : i32
    %27 = vector.broadcast %c16_i32 : i32 to vector<1x256xi32>
    %28 = arith.cmpi slt, %22, %27 : vector<1x256xi32>
    %29 = arith.andi %26, %28 : vector<1x256xi1>
    %c0_i32_15 = arith.constant 0 : i32
    %30 = vector.broadcast %c0_i32_15 : i32 to vector<1x256xi32>
    %31 = arith.cmpi sge, %24, %30 : vector<1x256xi32>
    %32 = arith.andi %29, %31 : vector<1x256xi1>
    %c16_i32_16 = arith.constant 16 : i32
    %33 = vector.broadcast %c16_i32_16 : i32 to vector<1x256xi32>
    %34 = arith.cmpi slt, %24, %33 : vector<1x256xi32>
    %35 = arith.andi %32, %34 : vector<1x256xi1>
    %cst_17 = arith.constant 0.000000e+00 : f32
    %36 = vector.shape_cast %35 : vector<1x256xi1> to vector<1x256xi1>
    %37 = vector.broadcast %36 : vector<1x256xi1> to vector<2x256xi1>
    %38 = vector.broadcast %cst_17 : f32 to vector<2x256xf32>
    %39 = arith.select %37, %20, %38 : vector<2x256xi1>, vector<2x256xf32>
    %cst_18 = arith.constant 0.000000e+00 : f32
    %40 = vector.broadcast %cst_18 : f32 to vector<2x16xf32>
    %41 = vector.extract_strided_slice %15 {offsets = [0, 0], sizes = [2, 240], strides = [1, 1]} : vector<2x256xf32> to vector<2x240xf32>
    %42 = tpu.concatenate %40, %41 in 1 : vector<2x16xf32>, vector<2x240xf32> -> vector<2x256xf32>
    %c-1_i32_19 = arith.constant -1 : i32
    %43 = vector.broadcast %c-1_i32_19 : i32 to vector<1x256xi32>
    %44 = arith.addi %16, %43 : vector<1x256xi32>
    %c0_i32_20 = arith.constant 0 : i32
    %45 = vector.broadcast %c0_i32_20 : i32 to vector<1x256xi32>
    %46 = arith.addi %17, %45 : vector<1x256xi32>
    %c0_i32_21 = arith.constant 0 : i32
    %47 = vector.broadcast %c0_i32_21 : i32 to vector<1x256xi32>
    %48 = arith.cmpi sge, %44, %47 : vector<1x256xi32>
    %c16_i32_22 = arith.constant 16 : i32
    %49 = vector.broadcast %c16_i32_22 : i32 to vector<1x256xi32>
    %50 = arith.cmpi slt, %44, %49 : vector<1x256xi32>
    %51 = arith.andi %48, %50 : vector<1x256xi1>
    %c0_i32_23 = arith.constant 0 : i32
    %52 = vector.broadcast %c0_i32_23 : i32 to vector<1x256xi32>
    %53 = arith.cmpi sge, %46, %52 : vector<1x256xi32>
    %54 = arith.andi %51, %53 : vector<1x256xi1>
    %c16_i32_24 = arith.constant 16 : i32
    %55 = vector.broadcast %c16_i32_24 : i32 to vector<1x256xi32>
    %56 = arith.cmpi slt, %46, %55 : vector<1x256xi32>
    %57 = arith.andi %54, %56 : vector<1x256xi1>
    %cst_25 = arith.constant 0.000000e+00 : f32
    %58 = vector.shape_cast %57 : vector<1x256xi1> to vector<1x256xi1>
    %59 = vector.broadcast %58 : vector<1x256xi1> to vector<2x256xi1>
    %60 = vector.broadcast %cst_25 : f32 to vector<2x256xf32>
    %61 = arith.select %59, %42, %60 : vector<2x256xi1>, vector<2x256xf32>
    %cst_26 = arith.constant 0.000000e+00 : f32
    %62 = vector.broadcast %cst_26 : f32 to vector<2x15xf32>
    %63 = vector.extract_strided_slice %15 {offsets = [0, 0], sizes = [2, 241], strides = [1, 1]} : vector<2x256xf32> to vector<2x241xf32>
    %64 = tpu.concatenate %62, %63 in 1 : vector<2x15xf32>, vector<2x241xf32> -> vector<2x256xf32>
    %c-1_i32_27 = arith.constant -1 : i32
    %65 = vector.broadcast %c-1_i32_27 : i32 to vector<1x256xi32>
    %66 = arith.addi %16, %65 : vector<1x256xi32>
    %c1_i32 = arith.constant 1 : i32
    %67 = vector.broadcast %c1_i32 : i32 to vector<1x256xi32>
    %68 = arith.addi %17, %67 : vector<1x256xi32>
    %c0_i32_28 = arith.constant 0 : i32
    %69 = vector.broadcast %c0_i32_28 : i32 to vector<1x256xi32>
    %70 = arith.cmpi sge, %66, %69 : vector<1x256xi32>
    %c16_i32_29 = arith.constant 16 : i32
    %71 = vector.broadcast %c16_i32_29 : i32 to vector<1x256xi32>
    %72 = arith.cmpi slt, %66, %71 : vector<1x256xi32>
    %73 = arith.andi %70, %72 : vector<1x256xi1>
    %c0_i32_30 = arith.constant 0 : i32
    %74 = vector.broadcast %c0_i32_30 : i32 to vector<1x256xi32>
    %75 = arith.cmpi sge, %68, %74 : vector<1x256xi32>
    %76 = arith.andi %73, %75 : vector<1x256xi1>
    %c16_i32_31 = arith.constant 16 : i32
    %77 = vector.broadcast %c16_i32_31 : i32 to vector<1x256xi32>
    %78 = arith.cmpi slt, %68, %77 : vector<1x256xi32>
    %79 = arith.andi %76, %78 : vector<1x256xi1>
    %cst_32 = arith.constant 0.000000e+00 : f32
    %80 = vector.shape_cast %79 : vector<1x256xi1> to vector<1x256xi1>
    %81 = vector.broadcast %80 : vector<1x256xi1> to vector<2x256xi1>
    %82 = vector.broadcast %cst_32 : f32 to vector<2x256xf32>
    %83 = arith.select %81, %64, %82 : vector<2x256xi1>, vector<2x256xf32>
    %cst_33 = arith.constant 0.000000e+00 : f32
    %84 = vector.broadcast %cst_33 : f32 to vector<2x1xf32>
    %85 = vector.extract_strided_slice %15 {offsets = [0, 0], sizes = [2, 255], strides = [1, 1]} : vector<2x256xf32> to vector<2x255xf32>
    %86 = tpu.concatenate %84, %85 in 1 : vector<2x1xf32>, vector<2x255xf32> -> vector<2x256xf32>
    %c0_i32_34 = arith.constant 0 : i32
    %87 = vector.broadcast %c0_i32_34 : i32 to vector<1x256xi32>
    %88 = arith.addi %16, %87 : vector<1x256xi32>
    %c-1_i32_35 = arith.constant -1 : i32
    %89 = vector.broadcast %c-1_i32_35 : i32 to vector<1x256xi32>
    %90 = arith.addi %17, %89 : vector<1x256xi32>
    %c0_i32_36 = arith.constant 0 : i32
    %91 = vector.broadcast %c0_i32_36 : i32 to vector<1x256xi32>
    %92 = arith.cmpi sge, %88, %91 : vector<1x256xi32>
    %c16_i32_37 = arith.constant 16 : i32
    %93 = vector.broadcast %c16_i32_37 : i32 to vector<1x256xi32>
    %94 = arith.cmpi slt, %88, %93 : vector<1x256xi32>
    %95 = arith.andi %92, %94 : vector<1x256xi1>
    %c0_i32_38 = arith.constant 0 : i32
    %96 = vector.broadcast %c0_i32_38 : i32 to vector<1x256xi32>
    %97 = arith.cmpi sge, %90, %96 : vector<1x256xi32>
    %98 = arith.andi %95, %97 : vector<1x256xi1>
    %c16_i32_39 = arith.constant 16 : i32
    %99 = vector.broadcast %c16_i32_39 : i32 to vector<1x256xi32>
    %100 = arith.cmpi slt, %90, %99 : vector<1x256xi32>
    %101 = arith.andi %98, %100 : vector<1x256xi1>
    %cst_40 = arith.constant 0.000000e+00 : f32
    %102 = vector.shape_cast %101 : vector<1x256xi1> to vector<1x256xi1>
    %103 = vector.broadcast %102 : vector<1x256xi1> to vector<2x256xi1>
    %104 = vector.broadcast %cst_40 : f32 to vector<2x256xf32>
    %105 = arith.select %103, %86, %104 : vector<2x256xi1>, vector<2x256xf32>
    %c0_i32_41 = arith.constant 0 : i32
    %106 = vector.broadcast %c0_i32_41 : i32 to vector<1x256xi32>
    %107 = arith.addi %16, %106 : vector<1x256xi32>
    %c0_i32_42 = arith.constant 0 : i32
    %108 = vector.broadcast %c0_i32_42 : i32 to vector<1x256xi32>
    %109 = arith.addi %17, %108 : vector<1x256xi32>
    %c0_i32_43 = arith.constant 0 : i32
    %110 = vector.broadcast %c0_i32_43 : i32 to vector<1x256xi32>
    %111 = arith.cmpi sge, %107, %110 : vector<1x256xi32>
    %c16_i32_44 = arith.constant 16 : i32
    %112 = vector.broadcast %c16_i32_44 : i32 to vector<1x256xi32>
    %113 = arith.cmpi slt, %107, %112 : vector<1x256xi32>
    %114 = arith.andi %111, %113 : vector<1x256xi1>
    %c0_i32_45 = arith.constant 0 : i32
    %115 = vector.broadcast %c0_i32_45 : i32 to vector<1x256xi32>
    %116 = arith.cmpi sge, %109, %115 : vector<1x256xi32>
    %117 = arith.andi %114, %116 : vector<1x256xi1>
    %c16_i32_46 = arith.constant 16 : i32
    %118 = vector.broadcast %c16_i32_46 : i32 to vector<1x256xi32>
    %119 = arith.cmpi slt, %109, %118 : vector<1x256xi32>
    %120 = arith.andi %117, %119 : vector<1x256xi1>
    %cst_47 = arith.constant 0.000000e+00 : f32
    %121 = vector.shape_cast %120 : vector<1x256xi1> to vector<1x256xi1>
    %122 = vector.broadcast %121 : vector<1x256xi1> to vector<2x256xi1>
    %123 = vector.broadcast %cst_47 : f32 to vector<2x256xf32>
    %124 = arith.select %122, %15, %123 : vector<2x256xi1>, vector<2x256xf32>
    %125 = vector.extract_strided_slice %15 {offsets = [0, 1], sizes = [2, 255], strides = [1, 1]} : vector<2x256xf32> to vector<2x255xf32>
    %cst_48 = arith.constant 0.000000e+00 : f32
    %126 = vector.broadcast %cst_48 : f32 to vector<2x1xf32>
    %127 = tpu.concatenate %125, %126 in 1 : vector<2x255xf32>, vector<2x1xf32> -> vector<2x256xf32>
    %c0_i32_49 = arith.constant 0 : i32
    %128 = vector.broadcast %c0_i32_49 : i32 to vector<1x256xi32>
    %129 = arith.addi %16, %128 : vector<1x256xi32>
    %c1_i32_50 = arith.constant 1 : i32
    %130 = vector.broadcast %c1_i32_50 : i32 to vector<1x256xi32>
    %131 = arith.addi %17, %130 : vector<1x256xi32>
    %c0_i32_51 = arith.constant 0 : i32
    %132 = vector.broadcast %c0_i32_51 : i32 to vector<1x256xi32>
    %133 = arith.cmpi sge, %129, %132 : vector<1x256xi32>
    %c16_i32_52 = arith.constant 16 : i32
    %134 = vector.broadcast %c16_i32_52 : i32 to vector<1x256xi32>
    %135 = arith.cmpi slt, %129, %134 : vector<1x256xi32>
    %136 = arith.andi %133, %135 : vector<1x256xi1>
    %c0_i32_53 = arith.constant 0 : i32
    %137 = vector.broadcast %c0_i32_53 : i32 to vector<1x256xi32>
    %138 = arith.cmpi sge, %131, %137 : vector<1x256xi32>
    %139 = arith.andi %136, %138 : vector<1x256xi1>
    %c16_i32_54 = arith.constant 16 : i32
    %140 = vector.broadcast %c16_i32_54 : i32 to vector<1x256xi32>
    %141 = arith.cmpi slt, %131, %140 : vector<1x256xi32>
    %142 = arith.andi %139, %141 : vector<1x256xi1>
    %cst_55 = arith.constant 0.000000e+00 : f32
    %143 = vector.shape_cast %142 : vector<1x256xi1> to vector<1x256xi1>
    %144 = vector.broadcast %143 : vector<1x256xi1> to vector<2x256xi1>
    %145 = vector.broadcast %cst_55 : f32 to vector<2x256xf32>
    %146 = arith.select %144, %127, %145 : vector<2x256xi1>, vector<2x256xf32>
    %147 = vector.extract_strided_slice %15 {offsets = [0, 15], sizes = [2, 241], strides = [1, 1]} : vector<2x256xf32> to vector<2x241xf32>
    %cst_56 = arith.constant 0.000000e+00 : f32
    %148 = vector.broadcast %cst_56 : f32 to vector<2x15xf32>
    %149 = tpu.concatenate %147, %148 in 1 : vector<2x241xf32>, vector<2x15xf32> -> vector<2x256xf32>
    %c1_i32_57 = arith.constant 1 : i32
    %150 = vector.broadcast %c1_i32_57 : i32 to vector<1x256xi32>
    %151 = arith.addi %16, %150 : vector<1x256xi32>
    %c-1_i32_58 = arith.constant -1 : i32
    %152 = vector.broadcast %c-1_i32_58 : i32 to vector<1x256xi32>
    %153 = arith.addi %17, %152 : vector<1x256xi32>
    %c0_i32_59 = arith.constant 0 : i32
    %154 = vector.broadcast %c0_i32_59 : i32 to vector<1x256xi32>
    %155 = arith.cmpi sge, %151, %154 : vector<1x256xi32>
    %c16_i32_60 = arith.constant 16 : i32
    %156 = vector.broadcast %c16_i32_60 : i32 to vector<1x256xi32>
    %157 = arith.cmpi slt, %151, %156 : vector<1x256xi32>
    %158 = arith.andi %155, %157 : vector<1x256xi1>
    %c0_i32_61 = arith.constant 0 : i32
    %159 = vector.broadcast %c0_i32_61 : i32 to vector<1x256xi32>
    %160 = arith.cmpi sge, %153, %159 : vector<1x256xi32>
    %161 = arith.andi %158, %160 : vector<1x256xi1>
    %c16_i32_62 = arith.constant 16 : i32
    %162 = vector.broadcast %c16_i32_62 : i32 to vector<1x256xi32>
    %163 = arith.cmpi slt, %153, %162 : vector<1x256xi32>
    %164 = arith.andi %161, %163 : vector<1x256xi1>
    %cst_63 = arith.constant 0.000000e+00 : f32
    %165 = vector.shape_cast %164 : vector<1x256xi1> to vector<1x256xi1>
    %166 = vector.broadcast %165 : vector<1x256xi1> to vector<2x256xi1>
    %167 = vector.broadcast %cst_63 : f32 to vector<2x256xf32>
    %168 = arith.select %166, %149, %167 : vector<2x256xi1>, vector<2x256xf32>
    %169 = vector.extract_strided_slice %15 {offsets = [0, 16], sizes = [2, 240], strides = [1, 1]} : vector<2x256xf32> to vector<2x240xf32>
    %cst_64 = arith.constant 0.000000e+00 : f32
    %170 = vector.broadcast %cst_64 : f32 to vector<2x16xf32>
    %171 = tpu.concatenate %169, %170 in 1 : vector<2x240xf32>, vector<2x16xf32> -> vector<2x256xf32>
    %c1_i32_65 = arith.constant 1 : i32
    %172 = vector.broadcast %c1_i32_65 : i32 to vector<1x256xi32>
    %173 = arith.addi %16, %172 : vector<1x256xi32>
    %c0_i32_66 = arith.constant 0 : i32
    %174 = vector.broadcast %c0_i32_66 : i32 to vector<1x256xi32>
    %175 = arith.addi %17, %174 : vector<1x256xi32>
    %c0_i32_67 = arith.constant 0 : i32
    %176 = vector.broadcast %c0_i32_67 : i32 to vector<1x256xi32>
    %177 = arith.cmpi sge, %173, %176 : vector<1x256xi32>
    %c16_i32_68 = arith.constant 16 : i32
    %178 = vector.broadcast %c16_i32_68 : i32 to vector<1x256xi32>
    %179 = arith.cmpi slt, %173, %178 : vector<1x256xi32>
    %180 = arith.andi %177, %179 : vector<1x256xi1>
    %c0_i32_69 = arith.constant 0 : i32
    %181 = vector.broadcast %c0_i32_69 : i32 to vector<1x256xi32>
    %182 = arith.cmpi sge, %175, %181 : vector<1x256xi32>
    %183 = arith.andi %180, %182 : vector<1x256xi1>
    %c16_i32_70 = arith.constant 16 : i32
    %184 = vector.broadcast %c16_i32_70 : i32 to vector<1x256xi32>
    %185 = arith.cmpi slt, %175, %184 : vector<1x256xi32>
    %186 = arith.andi %183, %185 : vector<1x256xi1>
    %cst_71 = arith.constant 0.000000e+00 : f32
    %187 = vector.shape_cast %186 : vector<1x256xi1> to vector<1x256xi1>
    %188 = vector.broadcast %187 : vector<1x256xi1> to vector<2x256xi1>
    %189 = vector.broadcast %cst_71 : f32 to vector<2x256xf32>
    %190 = arith.select %188, %171, %189 : vector<2x256xi1>, vector<2x256xf32>
    %191 = vector.extract_strided_slice %15 {offsets = [0, 17], sizes = [2, 239], strides = [1, 1]} : vector<2x256xf32> to vector<2x239xf32>
    %cst_72 = arith.constant 0.000000e+00 : f32
    %192 = vector.broadcast %cst_72 : f32 to vector<2x17xf32>
    %193 = tpu.concatenate %191, %192 in 1 : vector<2x239xf32>, vector<2x17xf32> -> vector<2x256xf32>
    %c1_i32_73 = arith.constant 1 : i32
    %194 = vector.broadcast %c1_i32_73 : i32 to vector<1x256xi32>
    %195 = arith.addi %16, %194 : vector<1x256xi32>
    %c1_i32_74 = arith.constant 1 : i32
    %196 = vector.broadcast %c1_i32_74 : i32 to vector<1x256xi32>
    %197 = arith.addi %17, %196 : vector<1x256xi32>
    %c0_i32_75 = arith.constant 0 : i32
    %198 = vector.broadcast %c0_i32_75 : i32 to vector<1x256xi32>
    %199 = arith.cmpi sge, %195, %198 : vector<1x256xi32>
    %c16_i32_76 = arith.constant 16 : i32
    %200 = vector.broadcast %c16_i32_76 : i32 to vector<1x256xi32>
    %201 = arith.cmpi slt, %195, %200 : vector<1x256xi32>
    %202 = arith.andi %199, %201 : vector<1x256xi1>
    %c0_i32_77 = arith.constant 0 : i32
    %203 = vector.broadcast %c0_i32_77 : i32 to vector<1x256xi32>
    %204 = arith.cmpi sge, %197, %203 : vector<1x256xi32>
    %205 = arith.andi %202, %204 : vector<1x256xi1>
    %c16_i32_78 = arith.constant 16 : i32
    %206 = vector.broadcast %c16_i32_78 : i32 to vector<1x256xi32>
    %207 = arith.cmpi slt, %197, %206 : vector<1x256xi32>
    %208 = arith.andi %205, %207 : vector<1x256xi1>
    %cst_79 = arith.constant 0.000000e+00 : f32
    %209 = vector.shape_cast %208 : vector<1x256xi1> to vector<1x256xi1>
    %210 = vector.broadcast %209 : vector<1x256xi1> to vector<2x256xi1>
    %211 = vector.broadcast %cst_79 : f32 to vector<2x256xf32>
    %212 = arith.select %210, %193, %211 : vector<2x256xi1>, vector<2x256xf32>
    %213 = tpu.concatenate %39, %61, %83, %105, %124, %146, %168, %190, %212 in 0 : vector<2x256xf32>, vector<2x256xf32>, vector<2x256xf32>, vector<2x256xf32>, vector<2x256xf32>, vector<2x256xf32>, vector<2x256xf32>, vector<2x256xf32>, vector<2x256xf32> -> vector<18x256xf32>
    %c0_80 = arith.constant 0 : index
    %c0_81 = arith.constant 0 : index
    %214 = vector.load %arg3[%c0_80, %c0_81] : memref<4x18xf32, #tpu.memory_space<vmem>>, vector<4x18xf32>
    %cst_82 = arith.constant dense<0.000000e+00> : vector<4x256xf32>
    %215 = tpu.matmul %214, %213, %cst_82 {dimension_numbers = #tpu.dot_dimension_numbers<[1], [0], [0], [1], [0, 0, 1, 1], [], []>} : vector<4x18xf32>, vector<18x256xf32>, vector<4x256xf32> -> vector<4x256xf32>
    %c0_83 = arith.constant 0 : index
    %c0_84 = arith.constant 0 : index
    %216 = vector.load %arg6[%c0_83, %c0_84] : memref<4x1xf32, #tpu.memory_space<vmem>>, vector<4x1xf32>
    %217 = vector.broadcast %216 : vector<4x1xf32> to vector<4x256xf32>
    %218 = arith.mulf %215, %217 : vector<4x256xf32>
    %c0_85 = arith.constant 0 : index
    %c0_86 = arith.constant 0 : index
    %219 = vector.load %arg7[%c0_85, %c0_86] : memref<4x1xf32, #tpu.memory_space<vmem>>, vector<4x1xf32>
    %220 = vector.broadcast %219 : vector<4x1xf32> to vector<4x256xf32>
    %221 = arith.addf %218, %220 : vector<4x256xf32>
    %222 = arith.negf %221 : vector<4x256xf32>
    %223 = math.exp %222 : vector<4x256xf32>
    %cst_87 = arith.constant 1.000000e+00 : f32
    %224 = vector.broadcast %cst_87 : f32 to vector<4x256xf32>
    %225 = arith.addf %224, %223 : vector<4x256xf32>
    %226 = arith.divf %224, %225 : vector<4x256xf32>
    %227 = arith.mulf %221, %226 : vector<4x256xf32>
    %228 = arith.addf %227, %1 : vector<4x256xf32>
    %c0_88 = arith.constant 0 : index
    %c0_89 = arith.constant 0 : index
    %c0_90 = arith.constant 0 : index
    %229 = vector.load %arg10[%c0_88, %c0_89, %c0_90] : memref<1x4x256xf32, #tpu.memory_space<vmem>>, vector<1x4x256xf32>
    %230 = vector.shape_cast %229 : vector<1x4x256xf32> to vector<4x256xf32>
    %231 = vector.shape_cast %228 : vector<4x256xf32> to vector<1x4x256xf32>
    tpu.vector_store %arg10[%c0_88, %c0_89, %c0_90], %231 {strides = array<i32>} : memref<1x4x256xf32, #tpu.memory_space<vmem>>, vector<1x4x256xf32>,
    return
  }
  func.func @transform_0(%arg0: i32) -> (i32, i32, i32) {
    %c0_i32 = arith.constant 0 : i32
    %c0_i32_0 = arith.constant 0 : i32
    %c0_i32_1 = arith.constant 0 : i32
    return %arg0, %c0_i32, %c0_i32_0 : i32, i32, i32
  }
  func.func @transform_1(%arg0: i32) -> (i32, i32) {
    %c0_i32 = arith.constant 0 : i32
    %c0_i32_0 = arith.constant 0 : i32
    %c0_i32_1 = arith.constant 0 : i32
    return %c0_i32, %c0_i32_0 : i32, i32
  }
  func.func @transform_2(%arg0: i32) -> (i32, i32) {
    %c0_i32 = arith.constant 0 : i32
    %c0_i32_0 = arith.constant 0 : i32
    %c0_i32_1 = arith.constant 0 : i32
    return %c0_i32, %c0_i32_0 : i32, i32
  }
  func.func @transform_3(%arg0: i32) -> (i32, i32) {
    %c0_i32 = arith.constant 0 : i32
    %c0_i32_0 = arith.constant 0 : i32
    %c0_i32_1 = arith.constant 0 : i32
    return %c0_i32, %c0_i32_0 : i32, i32
  }
  func.func @transform_4(%arg0: i32) -> (i32, i32) {
    %c0_i32 = arith.constant 0 : i32
    %c0_i32_0 = arith.constant 0 : i32
    %c0_i32_1 = arith.constant 0 : i32
    return %c0_i32, %c0_i32_0 : i32, i32
  }
  func.func @transform_5(%arg0: i32) -> (i32, i32) {
    %c0_i32 = arith.constant 0 : i32
    %c0_i32_0 = arith.constant 0 : i32
    %c0_i32_1 = arith.constant 0 : i32
    return %c0_i32, %c0_i32_0 : i32, i32
  }
  func.func @transform_6(%arg0: i32) -> (i32, i32) {
    %c0_i32 = arith.constant 0 : i32
    %c0_i32_0 = arith.constant 0 : i32
    %c0_i32_1 = arith.constant 0 : i32
    return %c0_i32, %c0_i32_0 : i32, i32
  }
  func.func @transform_7(%arg0: i32) -> (i32, i32) {
    %c0_i32 = arith.constant 0 : i32
    %c0_i32_0 = arith.constant 0 : i32
    %c0_i32_1 = arith.constant 0 : i32
    return %c0_i32, %c0_i32_0 : i32, i32
  }
  func.func @transform_8(%arg0: i32) -> (i32, i32) {
    %c0_i32 = arith.constant 0 : i32
    %c0_i32_0 = arith.constant 0 : i32
    %c0_i32_1 = arith.constant 0 : i32
    return %c0_i32, %c0_i32_0 : i32, i32
  }
  func.func @transform_9(%arg0: i32) -> (i32, i32, i32) {
    %c0_i32 = arith.constant 0 : i32
    %c0_i32_0 = arith.constant 0 : i32
    %c0_i32_1 = arith.constant 0 : i32
    return %arg0, %c0_i32, %c0_i32_0 : i32, i32, i32
  }
}

</mosaic_0001>

<llo_original>
// kernel: tpu_custom_call.1
$region0: #{tpu_custom_call.1}
  #allocation0 [shape = 'u32[]', space=smem, size = 0x4, offset = 0x4, fixed_abs, tag = 'smem constant byte address 0x4 - core index']
  #allocation1 [shape = 'u32[144,128]{1,0:T(1,128)}', space=vmem, size = 0x12000, scoped, tag = 'internal scratch']
  %s0 = inlined_call_operand.vmem [shape: f32[2,4,256], index: 0, kind: input, shape index: {}]
  %s1 = inlined_call_operand.hbm [shape: f32[2,4], index: 1, kind: input, shape index: {}]
  %s2 = inlined_call_operand.vmem [shape: f32[4,18], index: 2, kind: input, shape index: {}]
  %s3 = inlined_call_operand.vmem [shape: f32[2,1], index: 3, kind: input, shape index: {}]
  %s4 = inlined_call_operand.vmem [shape: f32[2,1], index: 4, kind: input, shape index: {}]
  %s5 = inlined_call_operand.vmem [shape: f32[4,1], index: 5, kind: input, shape index: {}]
  %s6 = inlined_call_operand.vmem [shape: f32[4,1], index: 6, kind: input, shape index: {}]
  %s7 = inlined_call_operand.vmem [shape: s32[1,256], index: 7, kind: input, shape index: {}]
  %s8 = inlined_call_operand.vmem [shape: s32[1,256], index: 8, kind: input, shape index: {}]
  %s9 = inlined_call_operand.hbm [shape: f32[2,4,256], index: 9, kind: output, shape index: {}]
  %s10 = sld [smem:[#allocation0]]
  $region73: #{tpu_custom_call.1} parent=0
    _
  %s12 = ssub.s32 1, %s10
  %s13 = scalar_select 0, %s12, %s10
  $region1: #{tpu_custom_call.1} parent=0
    #allocation2 [shape = 'u8[1024]{0}', space=vmem, size = 0x400, scoped, tag = 'input window, operand 1, single buffered']
    #allocation3 [shape = 's32[2]{0}', space=sflag, size = 0x8, scoped, tag = 'scoped memory for tpu_custom_call.1']
    #allocation4 [shape = 's32[2]{0}', space=sflag, size = 0x8, scoped, tag = 'scoped memory for tpu_custom_call.1']
    #allocation5 [shape = 'u8[8192]{0}', space=vmem, size = 0x2000, scoped, tag = 'output window, operand 0']
    %14 = vsyncpa [#allocation3], 0
    %15 = vsyncpa [#allocation4], 0
    %s16 = scalar_lea.sflag [#allocation4], 1
    %17 = vsyncpa %s16, 0
    loop: start=0, step=1, limit=4
    $region2: #{tpu_custom_call.1} parent=1 // loop_pre_header
      _
    $region3: #{tpu_custom_call.1} parent=1 // loop_header
      %s19 = sphi 0, %s23
      %p20 = scmp.ge.s32.totalorder %s19, 4
      %s29 = sphi 0, %s31
      %s32 = sphi 0, %s29
      %s33 = sphi 0, %s32
      %s49 = sphi 0, %s33
      %s53 = sphi 0, %s53
      %s55 = sphi 0, %s53
      %s56 = sphi 0, %s55
      %s70 = sphi 0, %s56
      %s74 = sphi 0, %s74
      %s76 = sphi 0, %s74
      %s77 = sphi 0, %s76
      %s91 = sphi 0, %s77
      %s95 = sphi 0, %s95
      %s97 = sphi 0, %s95
      %s98 = sphi 0, %s97
      %s112 = sphi 0, %s98
      %s116 = sphi 0, %s116
      %s118 = sphi 0, %s116
      %s119 = sphi 0, %s118
      %s133 = sphi 0, %s119
      %s137 = sphi 0, %s137
      %s139 = sphi 0, %s137
      %s140 = sphi 0, %s139
      %s154 = sphi 0, %s140
      %s158 = sphi 0, %s158
      %s160 = sphi 0, %s158
      %s161 = sphi 0, %s160
      %s175 = sphi 0, %s161
      %s179 = sphi 0, %s179
      %s181 = sphi 0, %s179
      %s182 = sphi 0, %s181
      %s196 = sphi 0, %s182
      %s200 = sphi 0, %s200
      %s202 = sphi 0, %s200
      %s203 = sphi 0, %s202
      %s217 = sphi 0, %s203
      %s223 = sphi 0, %s225
      %s226 = sphi 0, %s223
      %s227 = sphi 0, %s226
      %s243 = sphi 0, %s227
    $region4: #{tpu_custom_call.1} parent=1 // loop_header_branch
      %22 = sbr.rel (%p20) target = $region8
    $region5: #{tpu_custom_call.1} parent=1 // loop_body
      %s24 = ssub.s32 %s19, 1
      %s25 = ssub.s32 %s19, 2
      %s26 = sadd.s32 %s19, 1
      %s27 = ssub.s32 %s19, %s26
      %p28 = scmp.eq.s32.totalorder %s27, 0
      %s30 = sadd.s32 %s29, 1
      %s31 = scalar_select %p28, %s29, %s30
      %p34 = pneg %p28
      %p35 = scmp.eq.s32.totalorder %s19, 1
      %p36 = por %p34, %p35
      %p37 = scmp.ne.s32.totalorder %s29, %s32
      %p38 = scmp.eq.s32.totalorder %s19, 0
      %p39 = por %p37, %p38
      %p40 = scmp.ne.s32.totalorder %s29, %s32
      %p41 = scmp.eq.s32.totalorder %s24, 1
      %p42 = por %p40, %p41
      %p43 = scmp.ne.s32.totalorder %s32, %s33
      %p44 = scmp.eq.s32.totalorder %s24, 0
      %p45 = por %p43, %p44
      %p46 = scmp.ne.s32.totalorder %s32, %s33
      %p47 = scmp.eq.s32.totalorder %s25, 1
      %p48 = por %p46, %p47
      %p50 = scmp.ne.s32.totalorder %s33, %s49
      %p51 = scmp.eq.s32.totalorder %s25, 0
      %p52 = por %p50, %p51
      %s54 = sadd.s32 %s53, 1
      %p57 = scmp.eq.s32.totalorder %s19, 1
      %p58 = scmp.ne.s32.totalorder %s53, %s55
      %p59 = scmp.eq.s32.totalorder %s19, 0
      %p60 = por %p58, %p59
      %p61 = scmp.ne.s32.totalorder %s53, %s55
      %p62 = scmp.eq.s32.totalorder %s24, 1
      %p63 = por %p61, %p62
      %p64 = scmp.ne.s32.totalorder %s55, %s56
      %p65 = scmp.eq.s32.totalorder %s24, 0
      %p66 = por %p64, %p65
      %p67 = scmp.ne.s32.totalorder %s55, %s56
      %p68 = scmp.eq.s32.totalorder %s25, 1
      %p69 = por %p67, %p68
      %p71 = scmp.ne.s32.totalorder %s56, %s70
      %p72 = scmp.eq.s32.totalorder %s25, 0
      %p73 = por %p71, %p72
      %s75 = sadd.s32 %s74, 1
      %p78 = scmp.eq.s32.totalorder %s19, 1
      %p79 = scmp.ne.s32.totalorder %s74, %s76
      %p80 = scmp.eq.s32.totalorder %s19, 0
      %p81 = por %p79, %p80
      %p82 = scmp.ne.s32.totalorder %s74, %s76
      %p83 = scmp.eq.s32.totalorder %s24, 1
      %p84 = por %p82, %p83
      %p85 = scmp.ne.s32.totalorder %s76, %s77
      %p86 = scmp.eq.s32.totalorder %s24, 0
      %p87 = por %p85, %p86
      %p88 = scmp.ne.s32.totalorder %s76, %s77
      %p89 = scmp.eq.s32.totalorder %s25, 1
      %p90 = por %p88, %p89
      %p92 = scmp.ne.s32.totalorder %s77, %s91
      %p93 = scmp.eq.s32.totalorder %s25, 0
      %p94 = por %p92, %p93
      %s96 = sadd.s32 %s95, 1
      %p99 = scmp.eq.s32.totalorder %s19, 1
      %p100 = scmp.ne.s32.totalorder %s95, %s97
      %p101 = scmp.eq.s32.totalorder %s19, 0
      %p102 = por %p100, %p101
      %p103 = scmp.ne.s32.totalorder %s95, %s97
      %p104 = scmp.eq.s32.totalorder %s24, 1
      %p105 = por %p103, %p104
      %p106 = scmp.ne.s32.totalorder %s97, %s98
      %p107 = scmp.eq.s32.totalorder %s24, 0
      %p108 = por %p106, %p107
      %p109 = scmp.ne.s32.totalorder %s97, %s98
      %p110 = scmp.eq.s32.totalorder %s25, 1
      %p111 = por %p109, %p110
      %p113 = scmp.ne.s32.totalorder %s98, %s112
      %p114 = scmp.eq.s32.totalorder %s25, 0
      %p115 = por %p113, %p114
      %s117 = sadd.s32 %s116, 1
      %p120 = scmp.eq.s32.totalorder %s19, 1
      %p121 = scmp.ne.s32.totalorder %s116, %s118
      %p122 = scmp.eq.s32.totalorder %s19, 0
      %p123 = por %p121, %p122
      %p124 = scmp.ne.s32.totalorder %s116, %s118
      %p125 = scmp.eq.s32.totalorder %s24, 1
      %p126 = por %p124, %p125
      %p127 = scmp.ne.s32.totalorder %s118, %s119
      %p128 = scmp.eq.s32.totalorder %s24, 0
      %p129 = por %p127, %p128
      %p130 = scmp.ne.s32.totalorder %s118, %s119
      %p131 = scmp.eq.s32.totalorder %s25, 1
      %p132 = por %p130, %p131
      %p134 = scmp.ne.s32.totalorder %s119, %s133
      %p135 = scmp.eq.s32.totalorder %s25, 0
      %p136 = por %p134, %p135
      %s138 = sadd.s32 %s137, 1
      %p141 = scmp.eq.s32.totalorder %s19, 1
      %p142 = scmp.ne.s32.totalorder %s137, %s139
      %p143 = scmp.eq.s32.totalorder %s19, 0
      %p144 = por %p142, %p143
      %p145 = scmp.ne.s32.totalorder %s137, %s139
      %p146 = scmp.eq.s32.totalorder %s24, 1
      %p147 = por %p145, %p146
      %p148 = scmp.ne.s32.totalorder %s139, %s140
      %p149 = scmp.eq.s32.totalorder %s24, 0
      %p150 = por %p148, %p149
      %p151 = scmp.ne.s32.totalorder %s139, %s140
      %p152 = scmp.eq.s32.totalorder %s25, 1
      %p153 = por %p151, %p152
      %p155 = scmp.ne.s32.totalorder %s140, %s154
      %p156 = scmp.eq.s32.totalorder %s25, 0
      %p157 = por %p155, %p156
      %s159 = sadd.s32 %s158, 1
      %p162 = scmp.eq.s32.totalorder %s19, 1
      %p163 = scmp.ne.s32.totalorder %s158, %s160
      %p164 = scmp.eq.s32.totalorder %s19, 0
      %p165 = por %p163, %p164
      %p166 = scmp.ne.s32.totalorder %s158, %s160
      %p167 = scmp.eq.s32.totalorder %s24, 1
      %p168 = por %p166, %p167
      %p169 = scmp.ne.s32.totalorder %s160, %s161
      %p170 = scmp.eq.s32.totalorder %s24, 0
      %p171 = por %p169, %p170
      %p172 = scmp.ne.s32.totalorder %s160, %s161
      %p173 = scmp.eq.s32.totalorder %s25, 1
      %p174 = por %p172, %p173
      %p176 = scmp.ne.s32.totalorder %s161, %s175
      %p177 = scmp.eq.s32.totalorder %s25, 0
      %p178 = por %p176, %p177
      %s180 = sadd.s32 %s179, 1
      %p183 = scmp.eq.s32.totalorder %s19, 1
      %p184 = scmp.ne.s32.totalorder %s179, %s181
      %p185 = scmp.eq.s32.totalorder %s19, 0
      %p186 = por %p184, %p185
      %p187 = scmp.ne.s32.totalorder %s179, %s181
      %p188 = scmp.eq.s32.totalorder %s24, 1
      %p189 = por %p187, %p188
      %p190 = scmp.ne.s32.totalorder %s181, %s182
      %p191 = scmp.eq.s32.totalorder %s24, 0
      %p192 = por %p190, %p191
      %p193 = scmp.ne.s32.totalorder %s181, %s182
      %p194 = scmp.eq.s32.totalorder %s25, 1
      %p195 = por %p193, %p194
      %p197 = scmp.ne.s32.totalorder %s182, %s196
      %p198 = scmp.eq.s32.totalorder %s25, 0
      %p199 = por %p197, %p198
      %s201 = sadd.s32 %s200, 1
      %p204 = scmp.eq.s32.totalorder %s19, 1
      %p205 = scmp.ne.s32.totalorder %s200, %s202
      %p206 = scmp.eq.s32.totalorder %s19, 0
      %p207 = por %p205, %p206
      %p208 = scmp.ne.s32.totalorder %s200, %s202
      %p209 = scmp.eq.s32.totalorder %s24, 1
      %p210 = por %p208, %p209
      %p211 = scmp.ne.s32.totalorder %s202, %s203
      %p212 = scmp.eq.s32.totalorder %s24, 0
      %p213 = por %p211, %p212
      %p214 = scmp.ne.s32.totalorder %s202, %s203
      %p215 = scmp.eq.s32.totalorder %s25, 1
      %p216 = por %p214, %p215
      %p218 = scmp.ne.s32.totalorder %s203, %s217
      %p219 = scmp.eq.s32.totalorder %s25, 0
      %p220 = por %p218, %p219
      %s221 = ssub.s32 %s19, %s26
      %p222 = scmp.eq.s32.totalorder %s221, 0
      %s224 = sadd.s32 %s223, 1
      %s225 = scalar_select %p222, %s223, %s224
      %p228 = pneg %p222
      %p229 = scmp.eq.s32.totalorder %s19, 1
      %p230 = por %p228, %p229
      %p231 = scmp.ne.s32.totalorder %s223, %s226
      %p232 = scmp.eq.s32.totalorder %s19, 0
      %p233 = por %p231, %p232
      %p234 = scmp.ne.s32.totalorder %s223, %s226
      %p235 = scmp.eq.s32.totalorder %s24, 1
      %p236 = por %p234, %p235
      %p237 = scmp.ne.s32.totalorder %s226, %s227
      %p238 = scmp.eq.s32.totalorder %s24, 0
      %p239 = por %p237, %p238
      %p240 = scmp.ne.s32.totalorder %s226, %s227
      %p241 = scmp.eq.s32.totalorder %s25, 1
      %p242 = por %p240, %p241
      %p244 = scmp.ne.s32.totalorder %s227, %s243
      %p245 = scmp.eq.s32.totalorder %s25, 0
      %p246 = por %p244, %p245
      %p247 = scmp.le.s32.totalorder 1, %s19
      %p248 = scmp.lt.s32.totalorder %s19, 3
      %p249 = pnand %p247, %p248
      %p250 = pneg %p249
      // Predicated region
      $region9: #{tpu_custom_call.1} parent=5 // pred_check
        _
      $region10: #{tpu_custom_call.1} parent=5 // pred_check_branch
        %252 = sbr.rel (%p249) target = $region12
      $region11: #{tpu_custom_call.1} parent=5 // pred_region
        %s253 = ssub.s32 %s19, 1
        // Predicated region
        $region13: #{tpu_custom_call.1} parent=11 // pred_check
          %p254 = pneg %p66
        $region14: #{tpu_custom_call.1} parent=11 // pred_check_branch
          %256 = sbr.rel (%p254) target = $region16
        $region15: #{tpu_custom_call.1} parent=11 // pred_region
          %s258 = ssub.s32 32, 32
          %259 = vsyncadd [#allocation3], %s258
          %s261 = sshll.u32 [#allocation2], 4
          %s262 = int_to_ptr.vmem [resolvable:$true] %s261
          %264 = dma.hbm_to_vmem [thread:$0]  %s1, 32, %s262, [#allocation3]
        $region16: #{tpu_custom_call.1} parent=11 // pred_fallthru
          _
        // Predicated region
        $region17: #{tpu_custom_call.1} parent=11 // pred_check
          %p265 = pneg %p87
        $region18: #{tpu_custom_call.1} parent=11 // pred_check_branch
          %267 = sbr.rel (%p265) target = $region20
        $region19: #{tpu_custom_call.1} parent=11 // pred_region
          _
        $region20: #{tpu_custom_call.1} parent=11 // pred_fallthru
          _
        // Predicated region
        $region21: #{tpu_custom_call.1} parent=11 // pred_check
          %p268 = pneg %p108
        $region22: #{tpu_custom_call.1} parent=11 // pred_check_branch
          %270 = sbr.rel (%p268) target = $region24
        $region23: #{tpu_custom_call.1} parent=11 // pred_region
          _
        $region24: #{tpu_custom_call.1} parent=11 // pred_fallthru
          _
        // Predicated region
        $region25: #{tpu_custom_call.1} parent=11 // pred_check
          %p271 = pneg %p129
        $region26: #{tpu_custom_call.1} parent=11 // pred_check_branch
          %273 = sbr.rel (%p271) target = $region28
        $region27: #{tpu_custom_call.1} parent=11 // pred_region
          _
        $region28: #{tpu_custom_call.1} parent=11 // pred_fallthru
          _
        // Predicated region
        $region29: #{tpu_custom_call.1} parent=11 // pred_check
          %p274 = pneg %p150
        $region30: #{tpu_custom_call.1} parent=11 // pred_check_branch
          %276 = sbr.rel (%p274) target = $region32
        $region31: #{tpu_custom_call.1} parent=11 // pred_region
          _
        $region32: #{tpu_custom_call.1} parent=11 // pred_fallthru
          _
        // Predicated region
        $region33: #{tpu_custom_call.1} parent=11 // pred_check
          %p277 = pneg %p171
        $region34: #{tpu_custom_call.1} parent=11 // pred_check_branch
          %279 = sbr.rel (%p277) target = $region36
        $region35: #{tpu_custom_call.1} parent=11 // pred_region
          _
        $region36: #{tpu_custom_call.1} parent=11 // pred_fallthru
          _
        // Predicated region
        $region37: #{tpu_custom_call.1} parent=11 // pred_check
          %p280 = pneg %p192
        $region38: #{tpu_custom_call.1} parent=11 // pred_check_branch
          %282 = sbr.rel (%p280) target = $region40
        $region39: #{tpu_custom_call.1} parent=11 // pred_region
          _
        $region40: #{tpu_custom_call.1} parent=11 // pred_fallthru
          _
        // Predicated region
        $region41: #{tpu_custom_call.1} parent=11 // pred_check
          %p283 = pneg %p213
        $region42: #{tpu_custom_call.1} parent=11 // pred_check_branch
          %285 = sbr.rel (%p283) target = $region44
        $region43: #{tpu_custom_call.1} parent=11 // pred_region
          _
        $region44: #{tpu_custom_call.1} parent=11 // pred_fallthru
          _
      $region12: #{tpu_custom_call.1} parent=5 // pred_fallthru
        _
      %p286 = scmp.lt.s32.totalorder %s19, 2
      // Predicated region
      $region45: #{tpu_custom_call.1} parent=5 // pred_check
        %p287 = pneg %p286
      $region46: #{tpu_custom_call.1} parent=5 // pred_check_branch
        %289 = sbr.rel (%p287) target = $region48
      $region47: #{tpu_custom_call.1} parent=5 // pred_region
        // Predicated region
        $region49: #{tpu_custom_call.1} parent=47 // pred_check
          %p290 = pneg %p39
        $region50: #{tpu_custom_call.1} parent=47 // pred_check_branch
          %292 = sbr.rel (%p290) target = $region52
        $region51: #{tpu_custom_call.1} parent=47 // pred_region
          %p293 = scmp.lt.s32.totalorder %s19, 1
          %s294 = scalar_select %p293, %s19, 1
          %s295 = smul.addr %s294, 2
          %s296 = smul.addr %s295, 4
          %s297 = scalar_lea.vmem %s0, %s296
        $region52: #{tpu_custom_call.1} parent=47 // pred_fallthru
          _
      $region48: #{tpu_custom_call.1} parent=5 // pred_fallthru
        _
      %p298 = scmp.le.s32.totalorder 1, %s19
      %p299 = scmp.lt.s32.totalorder %s19, 3
      %p300 = pnand %p298, %p299
      %p301 = pneg %p300
      // Predicated region
      $region53: #{tpu_custom_call.1} parent=5 // pred_check
        _
      $region54: #{tpu_custom_call.1} parent=5 // pred_check_branch
        %303 = sbr.rel (%p300) target = $region56
      $region55: #{tpu_custom_call.1} parent=5 // pred_region
        %s304 = ssub.s32 %s19, 1
        // Predicated region
        $region57: #{tpu_custom_call.1} parent=55 // pred_check
          %p305 = pneg %p66
        $region58: #{tpu_custom_call.1} parent=55 // pred_check_branch
          %307 = sbr.rel (%p305) target = $region60
        $region59: #{tpu_custom_call.1} parent=55 // pred_region
          %308 = dma.done [#allocation3], 32
        $region60: #{tpu_custom_call.1} parent=55 // pred_fallthru
          _
        %p309 = scmp.lt.s32.totalorder %s24, 1
        %s310 = scalar_select %p309, %s24, 1
        %s311 = smul.addr %s310, 2
        %s312 = smul.addr %s311, 4
        %s313 = scalar_lea.vmem %s0, %s312
        %p314 = pneg %p45
        %p315 = pneg %p42
        %p316 = pneg %p66
        %p317 = pneg %p63
        %p318 = pneg %p87
        %p319 = pneg %p84
        %p320 = pneg %p108
        %p321 = pneg %p105
        %p322 = pneg %p129
        %p323 = pneg %p126
        %p324 = pneg %p150
        %p325 = pneg %p147
        %p326 = pneg %p171
        %p327 = pneg %p168
        %p328 = pneg %p192
        %p329 = pneg %p189
        %p330 = pneg %p213
        %p331 = pneg %p210
        %p332 = pneg %p239
        %p333 = pneg %p236
        %s334 = sand.u32 %s226, 1
        %s335 = scalar_lea.sflag [#allocation4], %s334
        %s336 = sand.u32 %s226, 1
        %s337 = smul.addr %s336, 8
        %s338 = scalar_lea.vmem [#allocation5], %s337
        %p339 = scmp.lt.s32.totalorder %s24, 1
        %s340 = scalar_select %p339, %s24, 1
        %s341 = smul.addr %s340, 2
        %s342 = smul.addr %s341, 4
        %s343 = scalar_lea.vmem %s0, %s342
        %v344 = vld [vmem:[%s343] sm:$0xff]
        %v345 = vld [vmem:[#allocation2] sm:$0x3]
        %v347 = vcombine.high %v344, %v344
        %vm348 = vcmask 31744
        %v350 = vsel %vm348, %v345, 0
        %vm352 = vcmask 1043456
        %v353 = vsel %vm352, %v344, 0
        %v355 = vsel %vm352, %v347, 0
        %357 = vmatprep.subr.mxu0 %v355
        %358 = vmatpush1.msra.mxu0 %v353
        %359 = vmatprep.subr.mxu0 0.0
        %360 = vmatpush1.msra.mxu0 0.0
        %361 = vmatprep.subr.mxu0 0.0
        %362 = vmatpush1.msra.mxu0 0.0
        %363 = vmatprep.subr.mxu0 0.0
        %364 = vmatpush1.msra.mxu0 0.0
        %365 = vmatprep.subr.mxu0 0.0
        %366 = vmatpush1.msra.mxu0 0.0
        %367 = vmatprep.subr.mxu0 0.0
        %368 = vmatpush1.msra.mxu0 0.0
        %369 = vmatprep.subr.mxu0 0.0
        %370 = vmatpush1.msra.mxu0 0.0
        %371 = vmatprep.subr.mxu0 0.0
        %372 = vmatpush1.msra.mxu0 0.0
        %373 = vmatprep.subr.mxu0 0.0
        %374 = vmatpush1.msra.mxu0 0.0
        %375 = vmatprep.subr.mxu0 0.0
        %376 = vmatpush1.msra.mxu0 0.0
        %377 = vmatprep.subr.mxu0 0.0
        %378 = vmatpush1.msra.mxu0 0.0
        %379 = vmatprep.subr.mxu0 0.0
        %380 = vmatpush1.msra.mxu0 0.0
        %381 = vmatprep.subr.mxu0 0.0
        %382 = vmatpush1.msra.mxu0 0.0
        %383 = vmatprep.subr.mxu0 0.0
        %384 = vmatpush1.msra.mxu0 0.0
        %385 = vmatprep.subr.mxu0 0.0
        %386 = vmatpush1.msra.mxu0 0.0
        %387 = vmatprep.subr.mxu0 0.0
        %388 = vmatpush1.msra.mxu0 0.0
        %389 = vmatprep.subr.mxu0 0.0
        %390 = vmatpush1.msra.mxu0 0.0
        %391 = vmatprep.subr.mxu0 0.0
        %392 = vmatpush1.msra.mxu0 0.0
        %393 = vmatprep.subr.mxu0 0.0
        %394 = vmatpush1.msra.mxu0 0.0
        %395 = vmatprep.subr.mxu0 0.0
        %396 = vmatpush1.msra.mxu0 0.0
        %397 = vmatprep.subr.mxu0 0.0
        %398 = vmatpush1.msra.mxu0 0.0
        %399 = vmatprep.subr.mxu0 0.0
        %400 = vmatpush1.msra.mxu0 0.0
        %401 = vmatprep.subr.mxu0 0.0
        %402 = vmatpush1.msra.mxu0 0.0
        %403 = vmatprep.subr.mxu0 0.0
        %404 = vmatpush1.msra.mxu0 0.0
        %405 = vmatprep.subr.mxu0 0.0
        %406 = vmatpush1.msra.mxu0 0.0
        %407 = vmatprep.subr.mxu0 0.0
        %408 = vmatpush1.msra.mxu0 0.0
        %409 = vmatprep.subr.mxu0 0.0
        %410 = vmatpush1.msra.mxu0 0.0
        %411 = vmatprep.subr.mxu0 0.0
        %412 = vmatpush1.msra.mxu0 0.0
        %413 = vmatprep.subr.mxu0 0.0
        %414 = vmatpush1.msra.mxu0 0.0
        %415 = vmatprep.subr.mxu0 0.0
        %416 = vmatpush1.msra.mxu0 0.0
        %417 = vmatprep.subr.mxu0 0.0
        %418 = vmatpush1.msra.mxu0 0.0
        %419 = vmatprep.subr.mxu0 0.0
        %420 = vmatpush1.msra.mxu0 0.0
        %421 = vmatprep.mubr.f32.mxu0 0.0
        %422 = vmatmul.mubr.f32.gmra.mrb[0].mxu0 %v350
        %v423 = vpop.f32.mrb[0].mxu0
        %v424 = vadd.f32 0.0, %v423
        %v425 = vpop.f32.mrb[0].mxu0
        %v426 = vadd.f32 0.0, %v425
        %427 = vdwg.mxu0
        %v428 = vld [vmem:[%s3] sm:$0x3]
        %430 = vset.pattern.permute.xlu0 0
        %431 = vperm.xlu0 %430, %v428
        %v432 = vpop.permute.xlu0 %431
        %v434 = vmul.f32 %v424, %v432
        %v435 = vmul.f32 %v426, %v432
        %v436 = vld [vmem:[%s4] sm:$0x3]
        %438 = vset.pattern.permute.xlu0 0
        %439 = vperm.xlu0 %438, %v436
        %v440 = vpop.permute.xlu0 %439
        %v442 = vadd.f32 %v434, %v440
        %v443 = vadd.f32 %v435, %v440
        %v444 = vxor.u32 %v442, 2147483648
        %v445 = vxor.u32 %v443, 2147483648
        %v446 = vmul.f32 %v444, 1.442695
        %v447 = vpow.pop %v446
        %v448 = vmul.f32 %v445, 1.442695
        %v449 = vpow.pop %v448
        %v450 = vadd.f32 %v447, 1.0
        %v451 = vadd.f32 %v449, 1.0
        %v452 = vrcp.pop %v450
        %v453 = vmul.f32 1.0, %v452
        %v454 = vrcp.pop %v451
        %v455 = vmul.f32 1.0, %v454
        %v456 = vmul.f32 %v442, %v453
        %v457 = vmul.f32 %v443, %v455
        %v458 = vld [vmem:[%s7] sm:$0x3]
        %v459 = vld [vmem:[%s8] sm:$0x3]
        %462 = vrot.lane.b32.xlu0 %v456, 17
        %v463 = vpop.permute.xlu0 %462
        %464 = vrot.lane.b32.xlu0 %v457, 17
        %v465 = vpop.permute.xlu0 %464
        %vm466 = vcmask 138240
        %v467 = vsel %vm466, %v463, %v465
        %v470 = vsel %vm466, 0.0, %v463
        %v471 = vadd.s32 %v458, 4294967295
        %v472 = vadd.s32 %v459, 4294967295
        %vm473 = vcmp.ge.s32.totalorder %v471, 0
        %vm474 = vcmp.lt.s32.totalorder %v471, 16
        %vm475 = vmand %vm473, %vm474
        %vm476 = vcmp.ge.s32.totalorder %v472, 0
        %vm477 = vmand %vm475, %vm476
        %vm478 = vcmp.lt.s32.totalorder %v472, 16
        %vm479 = vmand %vm477, %vm478
        %v480 = vsel %vm479, 1, 0
        %v481 = vlaneseq
        %v482 = vshrl.u32 %v481, 7
        %v483 = vsub.s32 0, %v482
        %v484 = vrot.slane %v480, %v483
        %v485 = vlaneseq
        %v486 = vshrl.u32 %v485, 7
        %v487 = vsub.s32 1, %v486
        %v488 = vrot.slane %v480, %v487
        %vm489 = vcmp.eq.s32.totalorder %v484, 1
        %vm490 = vcmp.eq.s32.totalorder %v488, 1
        %v491 = vsel %vm489, %v470, 0.0
        %v492 = vsel %vm490, %v467, 0.0
        %493 = vrot.lane.b32.xlu0 %v456, 16
        %v494 = vpop.permute.xlu0 %493
        %495 = vrot.lane.b32.xlu0 %v457, 16
        %v496 = vpop.permute.xlu0 %495
        %vm497 = vcmask 130048
        %v498 = vsel %vm497, %v494, %v496
        %v501 = vsel %vm497, 0.0, %v494
        %vm502 = vcmp.ge.s32.totalorder %v459, 0
        %vm503 = vmand %vm475, %vm502
        %vm504 = vcmp.lt.s32.totalorder %v459, 16
        %vm505 = vmand %vm503, %vm504
        %v506 = vsel %vm505, 1, 0
        %v507 = vlaneseq
        %v508 = vshrl.u32 %v507, 7
        %v509 = vsub.s32 0, %v508
        %v510 = vrot.slane %v506, %v509
        %v511 = vlaneseq
        %v512 = vshrl.u32 %v511, 7
        %v513 = vsub.s32 1, %v512
        %v514 = vrot.slane %v506, %v513
        %vm515 = vcmp.eq.s32.totalorder %v510, 1
        %vm516 = vcmp.eq.s32.totalorder %v514, 1
        %v517 = vsel %vm515, %v501, 0.0
        %v518 = vsel %vm516, %v498, 0.0
        %519 = vrot.lane.b32.xlu0 %v456, 15
        %v520 = vpop.permute.xlu0 %519
        %521 = vrot.lane.b32.xlu0 %v457, 15
        %v522 = vpop.permute.xlu0 %521
        %vm523 = vcmask 121856
        %v524 = vsel %vm523, %v520, %v522
        %v527 = vsel %vm523, 0.0, %v520
        %v528 = vadd.s32 %v459, 1
        %vm529 = vcmp.ge.s32.totalorder %v528, 0
        %vm530 = vmand %vm475, %vm529
        %vm531 = vcmp.lt.s32.totalorder %v528, 16
        %vm532 = vmand %vm530, %vm531
        %v533 = vsel %vm532, 1, 0
        %v534 = vlaneseq
        %v535 = vshrl.u32 %v534, 7
        %v536 = vsub.s32 0, %v535
        %v537 = vrot.slane %v533, %v536
        %v538 = vlaneseq
        %v539 = vshrl.u32 %v538, 7
        %v540 = vsub.s32 1, %v539
        %v541 = vrot.slane %v533, %v540
        %vm542 = vcmp.eq.s32.totalorder %v537, 1
        %vm543 = vcmp.eq.s32.totalorder %v541, 1
        %v544 = vsel %vm542, %v527, 0.0
        %v545 = vsel %vm543, %v524, 0.0
        %546 = vrot.lane.b32.xlu0 %v456, 1
        %v547 = vpop.permute.xlu0 %546
        %548 = vrot.lane.b32.xlu0 %v457, 1
        %v549 = vpop.permute.xlu0 %548
        %vm550 = vcmask 7168
        %v551 = vsel %vm550, %v547, %v549
        %v554 = vsel %vm550, 0.0, %v547
        %vm555 = vcmp.ge.s32.totalorder %v458, 0
        %vm556 = vcmp.lt.s32.totalorder %v458, 16
        %vm557 = vmand %vm555, %vm556
        %vm558 = vmand %vm557, %vm476
        %vm559 = vmand %vm558, %vm478
        %v560 = vsel %vm559, 1, 0
        %v561 = vlaneseq
        %v562 = vshrl.u32 %v561, 7
        %v563 = vsub.s32 0, %v562
        %v564 = vrot.slane %v560, %v563
        %v565 = vlaneseq
        %v566 = vshrl.u32 %v565, 7
        %v567 = vsub.s32 1, %v566
        %v568 = vrot.slane %v560, %v567
        %vm569 = vcmp.eq.s32.totalorder %v564, 1
        %vm570 = vcmp.eq.s32.totalorder %v568, 1
        %v571 = vsel %vm569, %v554, 0.0
        %v572 = vsel %vm570, %v551, 0.0
        %vm573 = vmand %vm557, %vm502
        %vm574 = vmand %vm573, %vm504
        %v575 = vsel %vm574, 1, 0
        %v576 = vlaneseq
        %v577 = vshrl.u32 %v576, 7
        %v578 = vsub.s32 0, %v577
        %v579 = vrot.slane %v575, %v578
        %v580 = vlaneseq
        %v581 = vshrl.u32 %v580, 7
        %v582 = vsub.s32 1, %v581
        %v583 = vrot.slane %v575, %v582
        %vm584 = vcmp.eq.s32.totalorder %v579, 1
        %vm585 = vcmp.eq.s32.totalorder %v583, 1
        %v586 = vsel %vm584, %v456, 0.0
        %v587 = vsel %vm585, %v457, 0.0
        %588 = vrot.lane.b32.xlu0 %v456, 127
        %v589 = vpop.permute.xlu0 %588
        %590 = vrot.lane.b32.xlu0 %v457, 127
        %v591 = vpop.permute.xlu0 %590
        %vm592 = vcmask 1039360
        %v593 = vsel %vm592, %v589, %v591
        %v596 = vsel %vm592, %v591, 0.0
        %vm597 = vmand %vm557, %vm529
        %vm598 = vmand %vm597, %vm531
        %v599 = vsel %vm598, 1, 0
        %v600 = vlaneseq
        %v601 = vshrl.u32 %v600, 7
        %v602 = vsub.s32 0, %v601
        %v603 = vrot.slane %v599, %v602
        %v604 = vlaneseq
        %v605 = vshrl.u32 %v604, 7
        %v606 = vsub.s32 1, %v605
        %v607 = vrot.slane %v599, %v606
        %vm608 = vcmp.eq.s32.totalorder %v603, 1
        %vm609 = vcmp.eq.s32.totalorder %v607, 1
        %v610 = vsel %vm608, %v593, 0.0
        %v611 = vsel %vm609, %v596, 0.0
        %612 = vrot.lane.b32.xlu0 %v456, 113
        %v613 = vpop.permute.xlu0 %612
        %614 = vrot.lane.b32.xlu0 %v457, 113
        %v615 = vpop.permute.xlu0 %614
        %vm616 = vcmask 924672
        %v617 = vsel %vm616, %v613, %v615
        %v620 = vsel %vm616, %v615, 0.0
        %v621 = vadd.s32 %v458, 1
        %vm622 = vcmp.ge.s32.totalorder %v621, 0
        %vm623 = vcmp.lt.s32.totalorder %v621, 16
        %vm624 = vmand %vm622, %vm623
        %vm625 = vmand %vm624, %vm476
        %vm626 = vmand %vm625, %vm478
        %v627 = vsel %vm626, 1, 0
        %v628 = vlaneseq
        %v629 = vshrl.u32 %v628, 7
        %v630 = vsub.s32 0, %v629
        %v631 = vrot.slane %v627, %v630
        %v632 = vlaneseq
        %v633 = vshrl.u32 %v632, 7
        %v634 = vsub.s32 1, %v633
        %v635 = vrot.slane %v627, %v634
        %vm636 = vcmp.eq.s32.totalorder %v631, 1
        %vm637 = vcmp.eq.s32.totalorder %v635, 1
        %v638 = vsel %vm636, %v617, 0.0
        %v639 = vsel %vm637, %v620, 0.0
        %640 = vrot.lane.b32.xlu0 %v456, 112
        %v641 = vpop.permute.xlu0 %640
        %642 = vrot.lane.b32.xlu0 %v457, 112
        %v643 = vpop.permute.xlu0 %642
        %vm644 = vcmask 916480
        %v645 = vsel %vm644, %v641, %v643
        %v648 = vsel %vm644, %v643, 0.0
        %vm649 = vmand %vm624, %vm502
        %vm650 = vmand %vm649, %vm504
        %v651 = vsel %vm650, 1, 0
        %v652 = vlaneseq
        %v653 = vshrl.u32 %v652, 7
        %v654 = vsub.s32 0, %v653
        %v655 = vrot.slane %v651, %v654
        %v656 = vlaneseq
        %v657 = vshrl.u32 %v656, 7
        %v658 = vsub.s32 1, %v657
        %v659 = vrot.slane %v651, %v658
        %vm660 = vcmp.eq.s32.totalorder %v655, 1
        %vm661 = vcmp.eq.s32.totalorder %v659, 1
        %v662 = vsel %vm660, %v645, 0.0
        %v663 = vsel %vm661, %v648, 0.0
        %664 = vrot.lane.b32.xlu0 %v456, 111
        %v665 = vpop.permute.xlu0 %664
        %666 = vrot.lane.b32.xlu0 %v457, 111
        %v667 = vpop.permute.xlu0 %666
        %vm668 = vcmask 908288
        %v669 = vsel %vm668, %v665, %v667
        %v672 = vsel %vm668, %v667, 0.0
        %vm673 = vmand %vm624, %vm529
        %vm674 = vmand %vm673, %vm531
        %v675 = vsel %vm674, 1, 0
        %v676 = vlaneseq
        %v677 = vshrl.u32 %v676, 7
        %v678 = vsub.s32 0, %v677
        %v679 = vrot.slane %v675, %v678
        %v680 = vlaneseq
        %v681 = vshrl.u32 %v680, 7
        %v682 = vsub.s32 1, %v681
        %v683 = vrot.slane %v675, %v682
        %vm684 = vcmp.eq.s32.totalorder %v679, 1
        %vm685 = vcmp.eq.s32.totalorder %v683, 1
        %v686 = vsel %vm684, %v669, 0.0
        %v687 = vsel %vm685, %v672, 0.0
        %v690 = vrot.slane %v517, 6
        %v691 = vrot.slane %v518, 6
        %v696 = vrot.slane %v544, 4
        %v697 = vrot.slane %v545, 4
        %v702 = vrot.slane %v571, 2
        %v703 = vrot.slane %v572, 2
        %v708 = vrot.slane %v610, 6
        %v709 = vrot.slane %v611, 6
        %v714 = vrot.slane %v638, 4
        %v715 = vrot.slane %v639, 4
        %v720 = vrot.slane %v662, 2
        %v721 = vrot.slane %v663, 2
        %vm724 = vcmask 1041408
        %v725 = vsel %vm724, %v491, %v690
        %v726 = vsel %vm724, %v492, %v691
        %v727 = vsel %vm352, %v725, %v696
        %v728 = vsel %vm352, %v726, %v697
        %vm729 = vcmask 1045504
        %v730 = vsel %vm729, %v727, %v702
        %v731 = vsel %vm729, %v728, %v703
        %v732 = vsel %vm724, %v586, %v708
        %v733 = vsel %vm724, %v587, %v709
        %v734 = vsel %vm352, %v732, %v714
        %v735 = vsel %vm352, %v733, %v715
        %v736 = vsel %vm729, %v734, %v720
        %v737 = vsel %vm729, %v735, %v721
        %v738 = vld [vmem:[%s2] sm:$0xf]
        %vm739 = vcmask 146432
        %v741 = vsel %vm739, %v738, 0
        %v744 = vsel %vm724, %v686, 0
        %v747 = vsel %vm724, %v687, 0
        %749 = vmatprep.subr.mxu0 %v731
        %750 = vmatpush1.msra.mxu0 %v730
        %751 = vmatprep.subr.mxu0 %v737
        %752 = vmatpush1.msra.mxu0 %v736
        %753 = vmatprep.subr.mxu0 %v747
        %754 = vmatpush1.msra.mxu0 %v744
        %755 = vmatprep.subr.mxu0 0.0
        %756 = vmatpush1.msra.mxu0 0.0
        %757 = vmatprep.subr.mxu0 0.0
        %758 = vmatpush1.msra.mxu0 0.0
        %759 = vmatprep.subr.mxu0 0.0
        %760 = vmatpush1.msra.mxu0 0.0
        %761 = vmatprep.subr.mxu0 0.0
        %762 = vmatpush1.msra.mxu0 0.0
        %763 = vmatprep.subr.mxu0 0.0
        %764 = vmatpush1.msra.mxu0 0.0
        %765 = vmatprep.subr.mxu0 0.0
        %766 = vmatpush1.msra.mxu0 0.0
        %767 = vmatprep.subr.mxu0 0.0
        %768 = vmatpush1.msra.mxu0 0.0
        %769 = vmatprep.subr.mxu0 0.0
        %770 = vmatpush1.msra.mxu0 0.0
        %771 = vmatprep.subr.mxu0 0.0
        %772 = vmatpush1.msra.mxu0 0.0
        %773 = vmatprep.subr.mxu0 0.0
        %774 = vmatpush1.msra.mxu0 0.0
        %775 = vmatprep.subr.mxu0 0.0
        %776 = vmatpush1.msra.mxu0 0.0
        %777 = vmatprep.subr.mxu0 0.0
        %778 = vmatpush1.msra.mxu0 0.0
        %779 = vmatprep.subr.mxu0 0.0
        %780 = vmatpush1.msra.mxu0 0.0
        %781 = vmatprep.subr.mxu0 0.0
        %782 = vmatpush1.msra.mxu0 0.0
        %783 = vmatprep.subr.mxu0 0.0
        %784 = vmatpush1.msra.mxu0 0.0
        %785 = vmatprep.subr.mxu0 0.0
        %786 = vmatpush1.msra.mxu0 0.0
        %787 = vmatprep.subr.mxu0 0.0
        %788 = vmatpush1.msra.mxu0 0.0
        %789 = vmatprep.subr.mxu0 0.0
        %790 = vmatpush1.msra.mxu0 0.0
        %791 = vmatprep.subr.mxu0 0.0
        %792 = vmatpush1.msra.mxu0 0.0
        %793 = vmatprep.subr.mxu0 0.0
        %794 = vmatpush1.msra.mxu0 0.0
        %795 = vmatprep.subr.mxu0 0.0
        %796 = vmatpush1.msra.mxu0 0.0
        %797 = vmatprep.subr.mxu0 0.0
        %798 = vmatpush1.msra.mxu0 0.0
        %799 = vmatprep.subr.mxu0 0.0
        %800 = vmatpush1.msra.mxu0 0.0
        %801 = vmatprep.subr.mxu0 0.0
        %802 = vmatpush1.msra.mxu0 0.0
        %803 = vmatprep.subr.mxu0 0.0
        %804 = vmatpush1.msra.mxu0 0.0
        %805 = vmatprep.subr.mxu0 0.0
        %806 = vmatpush1.msra.mxu0 0.0
        %807 = vmatprep.subr.mxu0 0.0
        %808 = vmatpush1.msra.mxu0 0.0
        %809 = vmatprep.subr.mxu0 0.0
        %810 = vmatpush1.msra.mxu0 0.0
        %811 = vmatprep.subr.mxu0 0.0
        %812 = vmatpush1.msra.mxu0 0.0
        %813 = vmatprep.mubr.f32.mxu0 0.0
        %814 = vmatmul.mubr.f32.gmra.mrb[0].mxu0 %v741
        %v815 = vpop.f32.mrb[0].mxu0
        %v816 = vadd.f32 0.0, %v815
        %v817 = vpop.f32.mrb[0].mxu0
        %v818 = vadd.f32 0.0, %v817
        %819 = vdwg.mxu0
        %v820 = vld [vmem:[%s5] sm:$0xf]
        %822 = vset.pattern.permute.xlu0 0
        %823 = vperm.xlu0 %822, %v820
        %v824 = vpop.permute.xlu0 %823
        %v826 = vmul.f32 %v816, %v824
        %v827 = vmul.f32 %v818, %v824
        %v828 = vld [vmem:[%s6] sm:$0xf]
        %830 = vset.pattern.permute.xlu0 0
        %831 = vperm.xlu0 %830, %v828
        %v832 = vpop.permute.xlu0 %831
        %v834 = vadd.f32 %v826, %v832
        %v835 = vadd.f32 %v827, %v832
        %v836 = vxor.u32 %v834, 2147483648
        %v837 = vxor.u32 %v835, 2147483648
        %v838 = vmul.f32 %v836, 1.442695
        %v839 = vpow.pop %v838
        %v840 = vmul.f32 %v837, 1.442695
        %v841 = vpow.pop %v840
        %v842 = vadd.f32 %v839, 1.0
        %v843 = vadd.f32 %v841, 1.0
        %v844 = vrcp.pop %v842
        %v845 = vmul.f32 1.0, %v844
        %v846 = vrcp.pop %v843
        %v847 = vmul.f32 1.0, %v846
        %v848 = vmul.f32 %v834, %v845
        %v849 = vmul.f32 %v835, %v847
        %v851 = vadd.f32 %v848, %v344
        %v852 = vadd.f32 %v849, %v347
        %v855 = vcombine.low %v851, %v852
        %857 = vst [vmem:[%s338] sm:$0xff] %v855
        %s858 = sand.u32 %s226, 1
        %s859 = scalar_lea.sflag [#allocation4], %s858
        %s860 = sand.u32 %s226, 1
        %s861 = smul.addr %s860, 8
        %s862 = scalar_lea.vmem [#allocation5], %s861
        // Predicated region
        $region61: #{tpu_custom_call.1} parent=55 // pred_check
          %p863 = pneg %p236
        $region62: #{tpu_custom_call.1} parent=55 // pred_check_branch
          %865 = sbr.rel (%p863) target = $region64
        $region63: #{tpu_custom_call.1} parent=55 // pred_region
          %s867 = ssub.s32 128, 128
          %868 = vsyncadd %s859, %s867
          %s869 = smul.addr %s24, 2
          %s870 = smul.addr %s869, 64
          %s871 = scalar_lea.hbm %s9, %s870
          %s873 = sshll.u32 %s862, 4
          %s874 = int_to_ptr.vmem [resolvable:$true] %s873
          %876 = dma.vmem_to_hbm [thread:$0]  %s874, 128, %s871, %s859
        $region64: #{tpu_custom_call.1} parent=55 // pred_fallthru
          _
      $region56: #{tpu_custom_call.1} parent=5 // pred_fallthru
        _
      %p877 = scmp.le.s32.totalorder 2, %s19
      // Predicated region
      $region65: #{tpu_custom_call.1} parent=5 // pred_check
        %p878 = pneg %p877
      $region66: #{tpu_custom_call.1} parent=5 // pred_check_branch
        %880 = sbr.rel (%p878) target = $region68
      $region67: #{tpu_custom_call.1} parent=5 // pred_region
        %s881 = ssub.s32 %s19, 2
        // Predicated region
        $region69: #{tpu_custom_call.1} parent=67 // pred_check
          %p882 = pneg %p242
        $region70: #{tpu_custom_call.1} parent=67 // pred_check_branch
          %884 = sbr.rel (%p882) target = $region72
        $region71: #{tpu_custom_call.1} parent=67 // pred_region
          %s885 = sand.u32 %s227, 1
          %s886 = scalar_lea.sflag [#allocation4], %s885
          %s887 = sand.u32 %s227, 1
          %s888 = smul.addr %s887, 8
          %s889 = scalar_lea.vmem [#allocation5], %s888
          %890 = dma.done %s886, 128
        $region72: #{tpu_custom_call.1} parent=67 // pred_fallthru
          _
      $region68: #{tpu_custom_call.1} parent=5 // pred_fallthru
        _
    $region6: #{tpu_custom_call.1} parent=1 // loop_footer
      %s23 = sadd.s32 1, %s19
    $region7: #{tpu_custom_call.1} parent=1 // loop_footer_branch
      %18 = sbr.rel target = $region3
    $region8: #{tpu_custom_call.1} parent=1 // loop_exit
      _
    %891 = vsyncpa [#allocation3], 1
    %s892 = scalar_lea.sflag [#allocation3], 1
    %893 = vsyncpa %s892, 1
    %894 = vsyncpa [#allocation4], 1
    %s895 = scalar_lea.sflag [#allocation4], 1
    %896 = vsyncpa %s895, 1

</llo_original>
